<compile_context>
chip_gen: v7x
topology: tpu7x:2x2x1
jax: 0.10.0
libtpu: 0.0.40
codegen_flags: <defaults>
</compile_context>

<pallas_src>
import functools

import jax
import jax.numpy as jnp
from jax import lax
from jax.experimental import pallas as pl
from jax.experimental.pallas import tpu as pltpu

_EPS = 1e-5
_INV_SQRT2 = 0.7071067811865475
_SQRT_2_OVER_PI = 0.7978845608028654


def _round_up(v, m):
    return (v + m - 1) // m * m


def _edge_glam_kernel(x_ref, w1_ref, b1_ref, w2_ref, b2_ref, out_ref,
                      *, mxu_dtype, approx_gelu):
    """One row tile: (x @ W1' + b1') -> GELU -> (@ W2 + b2)."""
    # Cast the streamed x tile to the MXU dtype in VMEM (no extra HBM pass).
    x = x_ref[...].astype(mxu_dtype)
    h = jnp.dot(x, w1_ref[...], preferred_element_type=jnp.float32)
    h = h + b1_ref[...]
    if approx_gelu:
        # tanh-based GELU: tanh goes to the EUP slot instead of a VPU erf poly.
        u = _SQRT_2_OVER_PI * (h + 0.044715 * (h * h * h))
        h = 0.5 * h * (1.0 + jnp.tanh(u))
    else:
        h = 0.5 * h * (1.0 + lax.erf(h * _INV_SQRT2))       # exact (erf) GELU
    out = jnp.dot(h.astype(w2_ref.dtype), w2_ref[...],
                  preferred_element_type=jnp.float32)
    out_ref[...] = (out + b2_ref[...]).astype(out_ref.dtype)


def make_edge_glam(params, *, tile_n=1024, mxu_dtype=jnp.bfloat16,
                   approx_gelu=True, out_dtype=jnp.float32):
    """Returns a jitted forward(x) closed over padded / pre-transposed weights.

    Weight transpose + H0 padding happens once here; only the O(F*H0) BatchNorm
    fold is done per call (it depends on batch statistics of x).
    """
    w1 = jnp.asarray(params["w1"], jnp.float32)              # [H0, F]
    w2 = jnp.asarray(params["w2"], jnp.float32)              # [O, H0]
    h0, f = w1.shape
    o = w2.shape[0]
    hp = _round_up(h0, 128)                                   # lane-dense hidden

    # One-time prep: transpose, zero-pad H0 to a multiple of 128.
    w1_t = jnp.zeros((f, hp), jnp.float32).at[:, :h0].set(w1.T)          # f32
    w2_t = jnp.zeros((hp, o), mxu_dtype).at[:h0, :].set(w2.T.astype(mxu_dtype))
    b1 = jnp.zeros((1, hp), jnp.float32).at[0, :h0].set(
        jnp.asarray(params["b1"], jnp.float32))
    b2 = jnp.asarray(params["b2"], jnp.float32).reshape(1, o)
    gamma = jnp.asarray(params["gamma"], jnp.float32)
    beta = jnp.asarray(params["beta"], jnp.float32)

    mxu_bytes = jnp.dtype(mxu_dtype).itemsize
    out_bytes = jnp.dtype(out_dtype).itemsize

    kernel = functools.partial(_edge_glam_kernel,
                               mxu_dtype=mxu_dtype, approx_gelu=approx_gelu)

    @jax.jit
    def forward(x):
        n = x.shape[0]
        # Row tile: multiple of 8 sublanes (x streamed as f32).  Last tile may
        # be ragged (out-of-bounds rows are discarded).
        # TODO(synk): bucket n to a few sizes to avoid one recompile per batch size.
        tn = min(tile_n, _round_up(n, 8))
        grid = (pl.cdiv(n, tn),)

        # ---- BatchNorm stats in one fused pass over x (f32, biased variance).
        xf = x.astype(jnp.float32)
        s1 = jnp.sum(xf, axis=0)
        s2 = jnp.sum(xf * xf, axis=0)
        mean = s1 / n
        var = jnp.maximum(s2 / n - mean * mean, 0.0)
        s = gamma * lax.rsqrt(var + _EPS)                     # [F]
        t = beta - mean * s                                   # [F]
        w1_eff = (w1_t * s[:, None]).astype(mxu_dtype)        # [F, Hp]
        b1_eff = b1 + (t @ w1_t)[None, :]                     # [1, Hp] f32

        # ---- VMEM budget (double-buffered streams, single-buffered weights,
        #      in-kernel temporaries), with headroom.
        needed = (2 * tn * f * 4                              # x tiles (f32)
                  + 2 * tn * o * out_bytes                    # out tiles
                  + f * hp * mxu_bytes + hp * 4               # W1', b1'
                  + hp * o * mxu_bytes + o * 4                # W2, b2
                  + tn * f * mxu_bytes                        # x cast temp
                  + tn * hp * (4 + mxu_bytes)                 # h f32 + cast
                  + tn * o * 4)                               # f32 out temp
        vmem_limit = int(min(max(2 * needed, 32 << 20), 64 << 20))

        out = pl.pallas_call(
            kernel,
            out_shape=jax.ShapeDtypeStruct((n, o), out_dtype),
            grid=grid,
            in_specs=[
                # streamed x row tiles (lane dim F uses full-array-dim exemption)
                pl.BlockSpec((tn, f), lambda i: (i, 0)),
                # resident operands: constant index_map -> single buffer each
                pl.BlockSpec((f, hp), lambda i: (0, 0),
                             pipeline_mode=pl.Buffered(1)),
                pl.BlockSpec((1, hp), lambda i: (0, 0),
                             pipeline_mode=pl.Buffered(1)),
                pl.BlockSpec((hp, o), lambda i: (0, 0),
                             pipeline_mode=pl.Buffered(1)),
                pl.BlockSpec((1, o), lambda i: (0, 0),
                             pipeline_mode=pl.Buffered(1)),
            ],
            out_specs=pl.BlockSpec((tn, o), lambda i: (i, 0)),
            compiler_params=pltpu.CompilerParams(
                dimension_semantics=("parallel",),            # megacore on v7x
                vmem_limit_bytes=vmem_limit,
            ),
        )(x, w1_eff, b1_eff, w2_t, b2)

        return out

    return forward


def init_params(key, input_, h0, output_):
    """Deterministic synthetic parameters (shapes match the torch module)."""
    k1, k2, k3, k4, k5, k6 = jax.random.split(key, 6)
    scale1 = 1.0 / jnp.sqrt(input_)
    scale2 = 1.0 / jnp.sqrt(h0)
    return {
        # BatchNorm affine params
        "gamma": 1.0 + 0.1 * jax.random.normal(k1, (input_,), jnp.float32),
        "beta": 0.1 * jax.random.normal(k2, (input_,), jnp.float32),
        # Linear1: weight [h0, input_], bias [h0]  (torch convention)
        "w1": scale1 * jax.random.normal(k3, (h0, input_), jnp.float32),
        "b1": scale1 * jax.random.normal(k4, (h0,), jnp.float32),
        # Linear2: weight [output_, h0], bias [output_]
        "w2": scale2 * jax.random.normal(k5, (output_, h0), jnp.float32),
        "b2": scale2 * jax.random.normal(k6, (output_,), jnp.float32),
    }


def _reference(x, p):
    """Pure-JAX f32 reference (un-folded BatchNorm -> Linear -> exact GELU -> Linear)."""
    mean = jnp.mean(x, axis=0, keepdims=True)
    var = jnp.mean((x - mean) ** 2, axis=0, keepdims=True)
    xn = (x - mean) / jnp.sqrt(var + _EPS) * p["gamma"] + p["beta"]
    h = xn @ p["w1"].T + p["b1"]
    h = 0.5 * h * (1.0 + lax.erf(h * _INV_SQRT2))
    return h @ p["w2"].T + p["b2"]


if __name__ == "__main__":
    # Small shapes: N=8 edges, input_=32 features, h=[64], output_=16.
    N, INPUT, H0, OUTPUT = 8, 32, 64, 16

    key = jax.random.PRNGKey(0)
    kx, kp = jax.random.split(key)
    x = jax.random.normal(kx, (N, INPUT), jnp.float32)
    params = init_params(kp, INPUT, H0, OUTPUT)

    ref = _reference(x, params)

    # Faithful path: f32 MXU + exact erf GELU -> tight tolerance.
    fwd_exact = make_edge_glam(params, mxu_dtype=jnp.float32, approx_gelu=False)
    out_exact = jax.block_until_ready(fwd_exact(x))
    assert out_exact.shape == (N, OUTPUT)
    assert jnp.allclose(out_exact, ref, atol=5e-4, rtol=5e-4), "f32/erf mismatch vs reference"

    # Perf path: bf16 MXU + tanh GELU (f32 accumulate/elementwise) -> loose tolerance.
    fwd_fast = make_edge_glam(params, mxu_dtype=jnp.bfloat16, approx_gelu=True)
    out_fast = jax.block_until_ready(fwd_fast(x))
    assert out_fast.shape == (N, OUTPUT)
    assert jnp.allclose(out_fast, ref, atol=5e-2, rtol=5e-2), "bf16/tanh mismatch vs reference"

    print("KERNEL_OK")
</pallas_src>

<mosaic_0001>
module attributes {stable_mosaic.version = 11 : i64} {
  func.func @_edge_glam_kernel(%arg0: i32, %arg1: memref<8x32xf32, #tpu.memory_space<vmem>>, %arg2: memref<32x128xf32, #tpu.memory_space<vmem>>, %arg3: memref<1x128xf32, #tpu.memory_space<vmem>>, %arg4: memref<128x16xf32, #tpu.memory_space<vmem>>, %arg5: memref<1x16xf32, #tpu.memory_space<vmem>>, %arg6: memref<8x16xf32, #tpu.memory_space<vmem>>) attributes {dimension_semantics = [#tpu.dimension_semantics<parallel>], iteration_bounds = array<i64: 1>, scalar_prefetch = 0 : i64, scratch_operands = 0 : i64, tpu.core_type = #tpu.core_type<tc>, window_params = [{transform_indices = @transform_0, window_bounds = array<i64: 8, 32>}, {pipeline_mode = #tpu.pipeline_mode<synchronous>, transform_indices = @transform_1, window_bounds = array<i64: 32, 128>}, {pipeline_mode = #tpu.pipeline_mode<synchronous>, transform_indices = @transform_2, window_bounds = array<i64: 1, 128>}, {pipeline_mode = #tpu.pipeline_mode<synchronous>, transform_indices = @transform_3, window_bounds = array<i64: 128, 16>}, {pipeline_mode = #tpu.pipeline_mode<synchronous>, transform_indices = @transform_4, window_bounds = array<i64: 1, 16>}, {transform_indices = @transform_5, window_bounds = array<i64: 8, 16>}]} {
    %c0 = arith.constant 0 : index
    %c0_0 = arith.constant 0 : index
    %0 = vector.load %arg1[%c0, %c0_0] : memref<8x32xf32, #tpu.memory_space<vmem>>, vector<8x32xf32>
    %c0_1 = arith.constant 0 : index
    %c0_2 = arith.constant 0 : index
    %1 = vector.load %arg2[%c0_1, %c0_2] : memref<32x128xf32, #tpu.memory_space<vmem>>, vector<32x128xf32>
    %cst = arith.constant dense<0.000000e+00> : vector<8x128xf32>
    %2 = tpu.matmul %0, %1, %cst {dimension_numbers = #tpu.dot_dimension_numbers<[1], [0], [0], [1], [0, 0, 1, 1], [], []>} : vector<8x32xf32>, vector<32x128xf32>, vector<8x128xf32> -> vector<8x128xf32>
    %c0_3 = arith.constant 0 : index
    %c0_4 = arith.constant 0 : index
    %3 = vector.load %arg3[%c0_3, %c0_4] : memref<1x128xf32, #tpu.memory_space<vmem>>, vector<1x128xf32>
    %4 = vector.broadcast %3 : vector<1x128xf32> to vector<8x128xf32>
    %5 = arith.addf %2, %4 : vector<8x128xf32>
    %cst_5 = arith.constant 5.000000e-01 : f32
    %6 = vector.broadcast %cst_5 : f32 to vector<8x128xf32>
    %7 = arith.mulf %6, %5 : vector<8x128xf32>
    %cst_6 = arith.constant 0.707106769 : f32
    %8 = vector.broadcast %cst_6 : f32 to vector<8x128xf32>
    %9 = arith.mulf %5, %8 : vector<8x128xf32>
    %10 = math.erf %9 : vector<8x128xf32>
    %cst_7 = arith.constant 1.000000e+00 : f32
    %11 = vector.broadcast %cst_7 : f32 to vector<8x128xf32>
    %12 = arith.addf %11, %10 : vector<8x128xf32>
    %13 = arith.mulf %7, %12 : vector<8x128xf32>
    %c0_8 = arith.constant 0 : index
    %c0_9 = arith.constant 0 : index
    %14 = vector.load %arg4[%c0_8, %c0_9] : memref<128x16xf32, #tpu.memory_space<vmem>>, vector<128x16xf32>
    %cst_10 = arith.constant dense<0.000000e+00> : vector<8x16xf32>
    %15 = tpu.matmul %13, %14, %cst_10 {dimension_numbers = #tpu.dot_dimension_numbers<[1], [0], [0], [1], [0, 0, 1, 1], [], []>} : vector<8x128xf32>, vector<128x16xf32>, vector<8x16xf32> -> vector<8x16xf32>
    %c0_11 = arith.constant 0 : index
    %c0_12 = arith.constant 0 : index
    %16 = vector.load %arg5[%c0_11, %c0_12] : memref<1x16xf32, #tpu.memory_space<vmem>>, vector<1x16xf32>
    %17 = vector.broadcast %16 : vector<1x16xf32> to vector<8x16xf32>
    %18 = arith.addf %15, %17 : vector<8x16xf32>
    %c0_13 = arith.constant 0 : index
    %c0_14 = arith.constant 0 : index
    %19 = vector.load %arg6[%c0_13, %c0_14] : memref<8x16xf32, #tpu.memory_space<vmem>>, vector<8x16xf32>
    tpu.vector_store %arg6[%c0_13, %c0_14], %18 {strides = array<i32>} : memref<8x16xf32, #tpu.memory_space<vmem>>, vector<8x16xf32>,
    return
  }
  func.func @transform_0(%arg0: i32) -> (i32, i32) {
    %c0_i32 = arith.constant 0 : i32
    %c0_i32_0 = arith.constant 0 : i32
    return %arg0, %c0_i32 : i32, i32
  }
  func.func @transform_1(%arg0: i32) -> (i32, i32) {
    %c0_i32 = arith.constant 0 : i32
    %c0_i32_0 = arith.constant 0 : i32
    %c0_i32_1 = arith.constant 0 : i32
    return %c0_i32, %c0_i32_0 : i32, i32
  }
  func.func @transform_2(%arg0: i32) -> (i32, i32) {
    %c0_i32 = arith.constant 0 : i32
    %c0_i32_0 = arith.constant 0 : i32
    %c0_i32_1 = arith.constant 0 : i32
    return %c0_i32, %c0_i32_0 : i32, i32
  }
  func.func @transform_3(%arg0: i32) -> (i32, i32) {
    %c0_i32 = arith.constant 0 : i32
    %c0_i32_0 = arith.constant 0 : i32
    %c0_i32_1 = arith.constant 0 : i32
    return %c0_i32, %c0_i32_0 : i32, i32
  }
  func.func @transform_4(%arg0: i32) -> (i32, i32) {
    %c0_i32 = arith.constant 0 : i32
    %c0_i32_0 = arith.constant 0 : i32
    %c0_i32_1 = arith.constant 0 : i32
    return %c0_i32, %c0_i32_0 : i32, i32
  }
  func.func @transform_5(%arg0: i32) -> (i32, i32) {
    %c0_i32 = arith.constant 0 : i32
    %c0_i32_0 = arith.constant 0 : i32
    return %arg0, %c0_i32 : i32, i32
  }
}

</mosaic_0001>

<llo_original>
// kernel: forward.1
$region0: #{forward.1}
  #allocation0 [shape = 'u32[]', space=smem, size = 0x4, offset = 0x4, fixed_abs, tag = 'smem constant byte address 0x4 - core index']
  #allocation1 [shape = 'u32[144,128]{1,0:T(1,128)}', space=vmem, size = 0x12000, scoped, tag = 'internal scratch']
  %s0 = inlined_call_operand.vmem [shape: f32[8,32], index: 0, kind: input, shape index: {}]
  %s1 = inlined_call_operand.vmem [shape: f32[32,128], index: 1, kind: input, shape index: {}]
  %s2 = inlined_call_operand.vmem [shape: f32[1,128], index: 2, kind: input, shape index: {}]
  %s3 = inlined_call_operand.vmem [shape: f32[128,16], index: 3, kind: input, shape index: {}]
  %s4 = inlined_call_operand.vmem [shape: f32[1,16], index: 4, kind: input, shape index: {}]
  %s5 = inlined_call_operand.hbm [shape: f32[8,16], index: 5, kind: output, shape index: {}]
  %s6 = sld [smem:[#allocation0]]
  $region30: #{forward.1} parent=0
    _
  %s8 = ssub.s32 1, %s6
  %s9 = scalar_select 0, %s8, %s6
  $region1: #{forward.1} parent=0
    #allocation2 [shape = 'u8[4096]{0}', space=vmem, size = 0x1000, scoped, tag = 'output window, operand 0, single buffered']
    #allocation3 [shape = 's32[1]{0}', space=sflag, size = 0x4, scoped, tag = 'scoped memory for forward.1']
    %10 = vsyncpa [#allocation3], 0
    // Predicated region
    $region2: #{forward.1} parent=1 // pred_check
      _
    $region3: #{forward.1} parent=1 // pred_check_branch
      %12 = sbr.rel (0) target = $region5
    $region4: #{forward.1} parent=1 // pred_region
      _
    $region5: #{forward.1} parent=1 // pred_fallthru
      _
    // Predicated region
    $region6: #{forward.1} parent=1 // pred_check
      _
    $region7: #{forward.1} parent=1 // pred_check_branch
      %14 = sbr.rel (0) target = $region9
    $region8: #{forward.1} parent=1 // pred_region
      _
    $region9: #{forward.1} parent=1 // pred_fallthru
      _
    // Predicated region
    $region10: #{forward.1} parent=1 // pred_check
      _
    $region11: #{forward.1} parent=1 // pred_check_branch
      %16 = sbr.rel (0) target = $region13
    $region12: #{forward.1} parent=1 // pred_region
      _
    $region13: #{forward.1} parent=1 // pred_fallthru
      _
    // Predicated region
    $region14: #{forward.1} parent=1 // pred_check
      _
    $region15: #{forward.1} parent=1 // pred_check_branch
      %18 = sbr.rel (0) target = $region17
    $region16: #{forward.1} parent=1 // pred_region
      _
    $region17: #{forward.1} parent=1 // pred_fallthru
      _
    // Predicated region
    $region18: #{forward.1} parent=1 // pred_check
      _
    $region19: #{forward.1} parent=1 // pred_check_branch
      %20 = sbr.rel (0) target = $region21
    $region20: #{forward.1} parent=1 // pred_region
      _
    $region21: #{forward.1} parent=1 // pred_fallthru
      _
    %v21 = vld [vmem:[%s0] sm:$0xff]
    %v22 = vld [vmem:[%s1] sm:$0xff]
    %v23 = vld [vmem:[%s1 + $0x8] sm:$0xff]
    %v24 = vld [vmem:[%s1 + $0x10] sm:$0xff]
    %v25 = vld [vmem:[%s1 + $0x18] sm:$0xff]
    %v26 = vld [vmem:[%s2] sm:$0x1]
    %v28 = vlaneseq
    %v29 = vshrl.u32 %v28, 7
    %v30 = vsub.s32 0, %v29
    %v31 = vrot.slane %v26, %v30
    %vm33 = vcmask 261120
    %v35 = vsel %vm33, %v21, 0
    %37 = vmatprep.subr.mxu0 0.0
    %38 = vmatpush1.msra.mxu0 %v22
    %39 = vmatprep.subr.mxu0 0.0
    %40 = vmatpush1.msra.mxu0 %v23
    %41 = vmatprep.subr.mxu0 0.0
    %42 = vmatpush1.msra.mxu0 %v24
    %43 = vmatprep.subr.mxu0 0.0
    %44 = vmatpush1.msra.mxu0 %v25
    %45 = vmatprep.subr.mxu0 0.0
    %46 = vmatpush1.msra.mxu0 0.0
    %47 = vmatprep.subr.mxu0 0.0
    %48 = vmatpush1.msra.mxu0 0.0
    %49 = vmatprep.subr.mxu0 0.0
    %50 = vmatpush1.msra.mxu0 0.0
    %51 = vmatprep.subr.mxu0 0.0
    %52 = vmatpush1.msra.mxu0 0.0
    %53 = vmatprep.subr.mxu0 0.0
    %54 = vmatpush1.msra.mxu0 0.0
    %55 = vmatprep.subr.mxu0 0.0
    %56 = vmatpush1.msra.mxu0 0.0
    %57 = vmatprep.subr.mxu0 0.0
    %58 = vmatpush1.msra.mxu0 0.0
    %59 = vmatprep.subr.mxu0 0.0
    %60 = vmatpush1.msra.mxu0 0.0
    %61 = vmatprep.subr.mxu0 0.0
    %62 = vmatpush1.msra.mxu0 0.0
    %63 = vmatprep.subr.mxu0 0.0
    %64 = vmatpush1.msra.mxu0 0.0
    %65 = vmatprep.subr.mxu0 0.0
    %66 = vmatpush1.msra.mxu0 0.0
    %67 = vmatprep.subr.mxu0 0.0
    %68 = vmatpush1.msra.mxu0 0.0
    %69 = vmatprep.subr.mxu0 0.0
    %70 = vmatpush1.msra.mxu0 0.0
    %71 = vmatprep.subr.mxu0 0.0
    %72 = vmatpush1.msra.mxu0 0.0
    %73 = vmatprep.subr.mxu0 0.0
    %74 = vmatpush1.msra.mxu0 0.0
    %75 = vmatprep.subr.mxu0 0.0
    %76 = vmatpush1.msra.mxu0 0.0
    %77 = vmatprep.subr.mxu0 0.0
    %78 = vmatpush1.msra.mxu0 0.0
    %79 = vmatprep.subr.mxu0 0.0
    %80 = vmatpush1.msra.mxu0 0.0
    %81 = vmatprep.subr.mxu0 0.0
    %82 = vmatpush1.msra.mxu0 0.0
    %83 = vmatprep.subr.mxu0 0.0
    %84 = vmatpush1.msra.mxu0 0.0
    %85 = vmatprep.subr.mxu0 0.0
    %86 = vmatpush1.msra.mxu0 0.0
    %87 = vmatprep.subr.mxu0 0.0
    %88 = vmatpush1.msra.mxu0 0.0
    %89 = vmatprep.subr.mxu0 0.0
    %90 = vmatpush1.msra.mxu0 0.0
    %91 = vmatprep.subr.mxu0 0.0
    %92 = vmatpush1.msra.mxu0 0.0
    %93 = vmatprep.subr.mxu0 0.0
    %94 = vmatpush1.msra.mxu0 0.0
    %95 = vmatprep.subr.mxu0 0.0
    %96 = vmatpush1.msra.mxu0 0.0
    %97 = vmatprep.subr.mxu0 0.0
    %98 = vmatpush1.msra.mxu0 0.0
    %99 = vmatprep.subr.mxu0 0.0
    %100 = vmatpush1.msra.mxu0 0.0
    %101 = vmatprep.mubr.f32.mxu0 0.0
    %102 = vmatmul.mubr.f32.gmra.mrb[0].mxu0 %v35
    %v103 = vpop.f32.mrb[0].mxu0
    %v104 = vadd.f32 %v31, %v103
    %v105 = vpop.f32.mrb[0].mxu0
    %106 = vdwg.mxu0
    %v107 = vmul.f32 %v104, 0.5
    %v108 = vmul.f32 %v104, 0.70710677
    %v109 = verf.f32.pop %v108
    %v110 = vadd.f32 %v109, 1.0
    %v111 = vmul.f32 %v107, %v110
    %v112 = vld [vmem:[%s3] sm:$0xff]
    %v113 = vld [vmem:[%s3 + $0x8] sm:$0xff]
    %v114 = vld [vmem:[%s3 + $0x10] sm:$0xff]
    %v115 = vld [vmem:[%s3 + $0x18] sm:$0xff]
    %v116 = vld [vmem:[%s3 + $0x20] sm:$0xff]
    %v117 = vld [vmem:[%s3 + $0x28] sm:$0xff]
    %v118 = vld [vmem:[%s3 + $0x30] sm:$0xff]
    %v119 = vld [vmem:[%s3 + $0x38] sm:$0xff]
    %v120 = vld [vmem:[%s3 + $0x40] sm:$0xff]
    %v121 = vld [vmem:[%s3 + $0x48] sm:$0xff]
    %v122 = vld [vmem:[%s3 + $0x50] sm:$0xff]
    %v123 = vld [vmem:[%s3 + $0x58] sm:$0xff]
    %v124 = vld [vmem:[%s3 + $0x60] sm:$0xff]
    %v125 = vld [vmem:[%s3 + $0x68] sm:$0xff]
    %v126 = vld [vmem:[%s3 + $0x70] sm:$0xff]
    %v127 = vld [vmem:[%s3 + $0x78] sm:$0xff]
    %v128 = vld [vmem:[%s4] sm:$0x1]
    %v130 = vlaneseq
    %v131 = vshrl.u32 %v130, 7
    %v132 = vsub.s32 0, %v131
    %v133 = vrot.slane %v128, %v132
    %135 = vmatprep.subr.mxu0 0.0
    %136 = vmatpush1.msra.mxu0 %v112
    %137 = vmatprep.subr.mxu0 0.0
    %138 = vmatpush1.msra.mxu0 %v113
    %139 = vmatprep.subr.mxu0 0.0
    %140 = vmatpush1.msra.mxu0 %v114
    %141 = vmatprep.subr.mxu0 0.0
    %142 = vmatpush1.msra.mxu0 %v115
    %143 = vmatprep.subr.mxu0 0.0
    %144 = vmatpush1.msra.mxu0 %v116
    %145 = vmatprep.subr.mxu0 0.0
    %146 = vmatpush1.msra.mxu0 %v117
    %147 = vmatprep.subr.mxu0 0.0
    %148 = vmatpush1.msra.mxu0 %v118
    %149 = vmatprep.subr.mxu0 0.0
    %150 = vmatpush1.msra.mxu0 %v119
    %151 = vmatprep.subr.mxu0 0.0
    %152 = vmatpush1.msra.mxu0 %v120
    %153 = vmatprep.subr.mxu0 0.0
    %154 = vmatpush1.msra.mxu0 %v121
    %155 = vmatprep.subr.mxu0 0.0
    %156 = vmatpush1.msra.mxu0 %v122
    %157 = vmatprep.subr.mxu0 0.0
    %158 = vmatpush1.msra.mxu0 %v123
    %159 = vmatprep.subr.mxu0 0.0
    %160 = vmatpush1.msra.mxu0 %v124
    %161 = vmatprep.subr.mxu0 0.0
    %162 = vmatpush1.msra.mxu0 %v125
    %163 = vmatprep.subr.mxu0 0.0
    %164 = vmatpush1.msra.mxu0 %v126
    %165 = vmatprep.subr.mxu0 0.0
    %166 = vmatpush1.msra.mxu0 %v127
    %167 = vmatprep.subr.mxu0 0.0
    %168 = vmatpush1.msra.mxu0 0.0
    %169 = vmatprep.subr.mxu0 0.0
    %170 = vmatpush1.msra.mxu0 0.0
    %171 = vmatprep.subr.mxu0 0.0
    %172 = vmatpush1.msra.mxu0 0.0
    %173 = vmatprep.subr.mxu0 0.0
    %174 = vmatpush1.msra.mxu0 0.0
    %175 = vmatprep.subr.mxu0 0.0
    %176 = vmatpush1.msra.mxu0 0.0
    %177 = vmatprep.subr.mxu0 0.0
    %178 = vmatpush1.msra.mxu0 0.0
    %179 = vmatprep.subr.mxu0 0.0
    %180 = vmatpush1.msra.mxu0 0.0
    %181 = vmatprep.subr.mxu0 0.0
    %182 = vmatpush1.msra.mxu0 0.0
    %183 = vmatprep.subr.mxu0 0.0
    %184 = vmatpush1.msra.mxu0 0.0
    %185 = vmatprep.subr.mxu0 0.0
    %186 = vmatpush1.msra.mxu0 0.0
    %187 = vmatprep.subr.mxu0 0.0
    %188 = vmatpush1.msra.mxu0 0.0
    %189 = vmatprep.subr.mxu0 0.0
    %190 = vmatpush1.msra.mxu0 0.0
    %191 = vmatprep.subr.mxu0 0.0
    %192 = vmatpush1.msra.mxu0 0.0
    %193 = vmatprep.subr.mxu0 0.0
    %194 = vmatpush1.msra.mxu0 0.0
    %195 = vmatprep.subr.mxu0 0.0
    %196 = vmatpush1.msra.mxu0 0.0
    %197 = vmatprep.subr.mxu0 0.0
    %198 = vmatpush1.msra.mxu0 0.0
    %199 = vmatprep.mubr.f32.mxu0 0.0
    %200 = vmatmul.mubr.f32.gmra.mrb[0].mxu0 %v111
    %v201 = vpop.f32.mrb[0].mxu0
    %v202 = vadd.f32 %v133, %v201
    %v203 = vpop.f32.mrb[0].mxu0
    %204 = vdwg.mxu0
    %vm205 = vcmask 130048
    %206 = vst.msk [vmem:[#allocation2] sm:$0xff] %vm205, %v202
    // Predicated region
    $region22: #{forward.1} parent=1 // pred_check
      _
    $region23: #{forward.1} parent=1 // pred_check_branch
      %208 = sbr.rel (0) target = $region25
    $region24: #{forward.1} parent=1 // pred_region
      %s210 = ssub.s32 128, 128
      %211 = vsyncadd [#allocation3], %s210
      %s213 = sshll.u32 [#allocation2], 4
      %s214 = int_to_ptr.vmem [resolvable:$true] %s213
      %216 = dma.vmem_to_hbm [thread:$0]  %s214, 128, %s5, [#allocation3]
    $region25: #{forward.1} parent=1 // pred_fallthru
      _
    // Predicated region
    $region26: #{forward.1} parent=1 // pred_check
      _
    $region27: #{forward.1} parent=1 // pred_check_branch
      %218 = sbr.rel (0) target = $region29
    $region28: #{forward.1} parent=1 // pred_region
      %219 = dma.done [#allocation3], 128
    $region29: #{forward.1} parent=1 // pred_fallthru
      _
    %220 = vsyncpa [#allocation3], 1

</llo_original>
